<compile_context>
chip_gen: v5e
topology: v5e:2x2
jax: 0.10.0
libtpu: 0.0.40
codegen_flags: <defaults>
</compile_context>

<pallas_src>
import functools

import jax
import jax.numpy as jnp
from jax.experimental import pallas as pl
from jax.experimental.pallas import tpu as pltpu


def _concat_dma_kernel(widths, *refs):
    """Issues one HBM->HBM DMA per input into its static output slice.

    refs = (*in_hbm_refs, out_hbm_ref, dma_sem).
    widths[i] = flattened per-batch width (C_i*H*W) of input i.
    """
    n = len(widths)
    in_refs = refs[:n]
    out_ref = refs[n]
    sem = refs[n + 1]

    copies = []
    offset = 0
    for i, (w, in_ref) in enumerate(zip(widths, in_refs)):
        cp = pltpu.make_async_copy(
            in_ref,                                 # contiguous (B, w) source in HBM
            out_ref.at[:, offset:offset + w],       # strided (B, w) window of output
            sem.at[i],
        )
        cp.start()                                  # launch all DMAs first ...
        copies.append(cp)
        offset += w
    for cp in copies:                               # ... then wait, so they overlap
        cp.wait()


def concat_channels(xs):
    """torch.concat(xs, dim=1) for a sequence of NCHW arrays, via Pallas DMAs."""
    xs = list(xs)
    B, _, H, W = xs[0].shape
    dtype = xs[0].dtype
    for x in xs:
        assert x.shape[0] == B and x.shape[2] == H and x.shape[3] == W
        assert x.dtype == dtype

    # Flatten each input to (B, C_i*H*W): channel concat == concat along the
    # flattened per-batch axis for row-major contiguous arrays.
    flats = [x.reshape(B, x.shape[1] * H * W) for x in xs]
    widths = tuple(f.shape[1] for f in flats)
    total_w = sum(widths)
    c_total = sum(x.shape[1] for x in xs)
    n_inputs = len(flats)

    kernel = functools.partial(_concat_dma_kernel, widths)

    out_flat = pl.pallas_call(
        kernel,
        out_shape=jax.ShapeDtypeStruct((B, total_w), dtype),
        # Raw HBM refs in and out: no auto HBM<->VMEM staging, no VMEM footprint,
        # no (8,128) block constraints, no v7x 64 MiB ceiling.
        in_specs=[pl.BlockSpec(memory_space=pl.ANY) for _ in flats],
        out_specs=pl.BlockSpec(memory_space=pl.ANY),
        scratch_shapes=[pltpu.SemaphoreType.DMA((n_inputs,))],
    )(*flats)

    # TODO(synk): if the concat output feeds another Pallas kernel, fuse the
    # concat into the consumer's index_map (scalar-prefetch per-input offsets)
    # to skip this extra HBM write+read entirely.
    return out_flat.reshape(B, c_total, H, W)


if __name__ == "__main__":
    key = jax.random.PRNGKey(0)
    k1, k2, k3 = jax.random.split(key, 3)

    # Small NCHW inputs with differing channel counts (concat dim = 1).
    x1 = jax.random.normal(k1, (2, 4, 16, 16), dtype=jnp.float32)
    x2 = jax.random.normal(k2, (2, 3, 16, 16), dtype=jnp.float32)
    x3 = jax.random.normal(k3, (2, 5, 16, 16), dtype=jnp.float32)

    out = concat_channels((x1, x2, x3))
    out = jax.block_until_ready(out)

    # Reference check against jnp.concatenate (same semantics as torch.concat dim=1).
    ref = jnp.concatenate((x1, x2, x3), axis=1)
    assert out.shape == ref.shape == (2, 12, 16, 16)
    assert jnp.array_equal(out, ref)

    print("KERNEL_OK")
</pallas_src>

<mosaic_0001>
module attributes {stable_mosaic.version = 11 : i64} {
  func.func @_concat_dma_kernel(%arg0: memref<2x1024xf32, #tpu.memory_space<any>>, %arg1: memref<2x768xf32, #tpu.memory_space<any>>, %arg2: memref<2x1280xf32, #tpu.memory_space<any>>, %arg3: memref<2x3072xf32, #tpu.memory_space<any>>, %arg4: memref<3x!tpu.dma_semaphore, #tpu.memory_space<semaphore_mem>>) attributes {dimension_semantics = [], scalar_prefetch = 0 : i64, scratch_operands = 1 : i64, tpu.core_type = #tpu.core_type<tc>} {
    %c0_i32 = arith.constant 0 : i32
    %c0_i32_0 = arith.constant 0 : i32
    %c0_i32_1 = arith.constant 0 : i32
    %0 = tpu.memref_slice %arg3[%c0_i32_0, %c0_i32_1] : memref<2x3072xf32, #tpu.memory_space<any>> -> memref<2x1024xf32, #tpu.memory_space<any>>
    %1 = tpu.memref_slice %arg4[%c0_i32] : memref<3x!tpu.dma_semaphore, #tpu.memory_space<semaphore_mem>> -> memref<1x!tpu.dma_semaphore, #tpu.memory_space<semaphore_mem>>
    %2 = tpu.memref_squeeze %1 : memref<1x!tpu.dma_semaphore, #tpu.memory_space<semaphore_mem>> -> memref<!tpu.dma_semaphore, #tpu.memory_space<semaphore_mem>>
    tpu.enqueue_dma source(%arg0 : memref<2x1024xf32, #tpu.memory_space<any>>) target(%0 : memref<2x1024xf32, #tpu.memory_space<any>>) target_semaphore(%2 : memref<!tpu.dma_semaphore, #tpu.memory_space<semaphore_mem>>)
    %c1_i32 = arith.constant 1 : i32
    %c0_i32_2 = arith.constant 0 : i32
    %c1024_i32 = arith.constant 1024 : i32
    %3 = tpu.memref_slice %arg3[%c0_i32_2, %c1024_i32] : memref<2x3072xf32, #tpu.memory_space<any>> -> memref<2x768xf32, #tpu.memory_space<any>>
    %4 = tpu.memref_slice %arg4[%c1_i32] : memref<3x!tpu.dma_semaphore, #tpu.memory_space<semaphore_mem>> -> memref<1x!tpu.dma_semaphore, #tpu.memory_space<semaphore_mem>>
    %5 = tpu.memref_squeeze %4 : memref<1x!tpu.dma_semaphore, #tpu.memory_space<semaphore_mem>> -> memref<!tpu.dma_semaphore, #tpu.memory_space<semaphore_mem>>
    tpu.enqueue_dma source(%arg1 : memref<2x768xf32, #tpu.memory_space<any>>) target(%3 : memref<2x768xf32, #tpu.memory_space<any>>) target_semaphore(%5 : memref<!tpu.dma_semaphore, #tpu.memory_space<semaphore_mem>>)
    %c2_i32 = arith.constant 2 : i32
    %c0_i32_3 = arith.constant 0 : i32
    %c1792_i32 = arith.constant 1792 : i32
    %6 = tpu.memref_slice %arg3[%c0_i32_3, %c1792_i32] : memref<2x3072xf32, #tpu.memory_space<any>> -> memref<2x1280xf32, #tpu.memory_space<any>>
    %7 = tpu.memref_slice %arg4[%c2_i32] : memref<3x!tpu.dma_semaphore, #tpu.memory_space<semaphore_mem>> -> memref<1x!tpu.dma_semaphore, #tpu.memory_space<semaphore_mem>>
    %8 = tpu.memref_squeeze %7 : memref<1x!tpu.dma_semaphore, #tpu.memory_space<semaphore_mem>> -> memref<!tpu.dma_semaphore, #tpu.memory_space<semaphore_mem>>
    tpu.enqueue_dma source(%arg2 : memref<2x1280xf32, #tpu.memory_space<any>>) target(%6 : memref<2x1280xf32, #tpu.memory_space<any>>) target_semaphore(%8 : memref<!tpu.dma_semaphore, #tpu.memory_space<semaphore_mem>>)
    %c0_i32_4 = arith.constant 0 : i32
    %c0_i32_5 = arith.constant 0 : i32
    %c0_i32_6 = arith.constant 0 : i32
    %9 = tpu.memref_slice %arg3[%c0_i32_5, %c0_i32_6] : memref<2x3072xf32, #tpu.memory_space<any>> -> memref<2x1024xf32, #tpu.memory_space<any>>
    %10 = tpu.memref_slice %arg4[%c0_i32_4] : memref<3x!tpu.dma_semaphore, #tpu.memory_space<semaphore_mem>> -> memref<1x!tpu.dma_semaphore, #tpu.memory_space<semaphore_mem>>
    %11 = tpu.memref_squeeze %10 : memref<1x!tpu.dma_semaphore, #tpu.memory_space<semaphore_mem>> -> memref<!tpu.dma_semaphore, #tpu.memory_space<semaphore_mem>>
    tpu.wait_dma2 semaphore(%11 : memref<!tpu.dma_semaphore, #tpu.memory_space<semaphore_mem>>) src(%arg0 : memref<2x1024xf32, #tpu.memory_space<any>>) dst(%9 : memref<2x1024xf32, #tpu.memory_space<any>>)
    %c1_i32_7 = arith.constant 1 : i32
    %c0_i32_8 = arith.constant 0 : i32
    %c1024_i32_9 = arith.constant 1024 : i32
    %12 = tpu.memref_slice %arg3[%c0_i32_8, %c1024_i32_9] : memref<2x3072xf32, #tpu.memory_space<any>> -> memref<2x768xf32, #tpu.memory_space<any>>
    %13 = tpu.memref_slice %arg4[%c1_i32_7] : memref<3x!tpu.dma_semaphore, #tpu.memory_space<semaphore_mem>> -> memref<1x!tpu.dma_semaphore, #tpu.memory_space<semaphore_mem>>
    %14 = tpu.memref_squeeze %13 : memref<1x!tpu.dma_semaphore, #tpu.memory_space<semaphore_mem>> -> memref<!tpu.dma_semaphore, #tpu.memory_space<semaphore_mem>>
    tpu.wait_dma2 semaphore(%14 : memref<!tpu.dma_semaphore, #tpu.memory_space<semaphore_mem>>) src(%arg1 : memref<2x768xf32, #tpu.memory_space<any>>) dst(%12 : memref<2x768xf32, #tpu.memory_space<any>>)
    %c2_i32_10 = arith.constant 2 : i32
    %c0_i32_11 = arith.constant 0 : i32
    %c1792_i32_12 = arith.constant 1792 : i32
    %15 = tpu.memref_slice %arg3[%c0_i32_11, %c1792_i32_12] : memref<2x3072xf32, #tpu.memory_space<any>> -> memref<2x1280xf32, #tpu.memory_space<any>>
    %16 = tpu.memref_slice %arg4[%c2_i32_10] : memref<3x!tpu.dma_semaphore, #tpu.memory_space<semaphore_mem>> -> memref<1x!tpu.dma_semaphore, #tpu.memory_space<semaphore_mem>>
    %17 = tpu.memref_squeeze %16 : memref<1x!tpu.dma_semaphore, #tpu.memory_space<semaphore_mem>> -> memref<!tpu.dma_semaphore, #tpu.memory_space<semaphore_mem>>
    tpu.wait_dma2 semaphore(%17 : memref<!tpu.dma_semaphore, #tpu.memory_space<semaphore_mem>>) src(%arg2 : memref<2x1280xf32, #tpu.memory_space<any>>) dst(%15 : memref<2x1280xf32, #tpu.memory_space<any>>)
    return
  }
}

</mosaic_0001>

<llo_original>
// kernel: tpu_custom_call.1
$region0: #{tpu_custom_call.1}
  #allocation0 [shape = 'u32[]', space=smem, size = 0x4, offset = 0x4, fixed_abs, tag = 'smem constant byte address 0x4 - core index']
  #allocation1 [shape = 'u32[72,128]{1,0:T(1,128)}', space=vmem, size = 0x9000, scoped, tag = 'internal scratch']
  #allocation2 [shape = 's32[3]{0}', space=sflag, size = 0xc, scoped, tag = 'scratch operand']
  #allocation3 [shape = 's32[]', space=sflag, size = 0x4, offset = 0, fixed_abs, tag = 'sflag constant byte address 0x0 - dummy sync flag']
  #allocation4 [shape = 'u32[0]{0}', space=smem, size = 0, offset = 0, fixed_abs, tag = 'smem constant byte address 0x0 - null']
  #allocation5 [shape = 's32[]', space=sflag, size = 0x4, offset = 0, fixed_abs, tag = 'sflag constant byte address 0x0 - dummy sync flag']
  #allocation6 [shape = 'u32[0]{0}', space=smem, size = 0, offset = 0, fixed_abs, tag = 'smem constant byte address 0x0 - null']
  #allocation7 [shape = 's32[]', space=sflag, size = 0x4, offset = 0, fixed_abs, tag = 'sflag constant byte address 0x0 - dummy sync flag']
  #allocation8 [shape = 'u32[0]{0}', space=smem, size = 0, offset = 0, fixed_abs, tag = 'smem constant byte address 0x0 - null']
  %s0 = inlined_call_operand.hbm [shape: f32[2,1024], index: 0, kind: input, shape index: {}]
  %s1 = inlined_call_operand.hbm [shape: f32[2,768], index: 1, kind: input, shape index: {}]
  %s2 = inlined_call_operand.hbm [shape: f32[2,1280], index: 2, kind: input, shape index: {}]
  %s3 = inlined_call_operand.hbm [shape: f32[2,3072], index: 3, kind: output, shape index: {}]
  %s4 = sld [smem:[#allocation0]]
  $region2: #{tpu_custom_call.1} parent=0
    _
  %s6 = ssub.s32 1, %s4
  %s7 = scalar_select 0, %s6, %s4
  %s9 = sshll.u32 1, 14
  %s10 = sxor.u32 4294967295, %s9
  %s12 = sshll.u32 %s0, 4
  %s13 = int_to_ptr.hbm [resolvable:$true] %s12
  %s14 = sshll.u32 %s3, 4
  %s15 = int_to_ptr.hbm [resolvable:$true] %s14
  %18 = dma.general %s13, 256, %s15, [#allocation2], [#allocation3], [#allocation4], 0, 0
  %s19 = scalar_lea.hbm %s3, 16
  %s20 = scalar_lea.sflag [#allocation2], 1
  %s22 = sshll.u32 1, 14
  %s23 = sxor.u32 4294967295, %s22
  %s25 = sshll.u32 %s1, 4
  %s26 = int_to_ptr.hbm [resolvable:$true] %s25
  %s27 = sshll.u32 %s19, 4
  %s28 = int_to_ptr.hbm [resolvable:$true] %s27
  %31 = dma.general %s26, 192, %s28, %s20, [#allocation5], [#allocation6], 0, 0
  %s32 = scalar_lea.hbm %s3, 28
  %s33 = scalar_lea.sflag [#allocation2], 2
  %s35 = sshll.u32 1, 14
  %s36 = sxor.u32 4294967295, %s35
  %s38 = sshll.u32 %s2, 4
  %s39 = int_to_ptr.hbm [resolvable:$true] %s38
  %s40 = sshll.u32 %s32, 4
  %s41 = int_to_ptr.hbm [resolvable:$true] %s40
  %44 = dma.general %s39, 320, %s41, %s33, [#allocation7], [#allocation8], 0, 0
  %s45 = smul.u32 2, 1
  %s46 = smul.u32 %s45, 8
  %s47 = sshll.u32 %s46, 4
  %48 = dma.done [#allocation2], %s47
  %s49 = smul.u32 %s45, 6
  %s50 = sshll.u32 %s49, 4
  %51 = dma.done %s20, %s50
  %s52 = smul.u32 %s45, 10
  %s53 = sshll.u32 %s52, 4
  %54 = dma.done %s33, %s53
  %55 = vsyncmov [#allocation2]
  %s56 = vpop.sfrf %55
  %p57 = scmp.eq.s32.totalorder %s56, 0
  %p58 = pneg %p57
  %60 = shalt.err (%p58)
  %s61 = scalar_lea.sflag [#allocation2], 1
  %62 = vsyncmov %s61
  %s63 = vpop.sfrf %62
  %p64 = scmp.eq.s32.totalorder %s63, 0
  %p65 = pneg %p64
  %67 = shalt.err (%p65)
  %s68 = scalar_lea.sflag [#allocation2], 2
  %69 = vsyncmov %s68
  %s70 = vpop.sfrf %69
  %p71 = scmp.eq.s32.totalorder %s70, 0
  %p72 = pneg %p71
  %74 = shalt.err (%p72)

</llo_original>
